<compile_context>
chip_gen: v6e
topology: v6e:2x2x1
jax: 0.10.0
libtpu: 0.0.40
codegen_flags: <defaults>
</compile_context>

<pallas_src>
from functools import partial

import jax
import jax.numpy as jnp
from jax.experimental import pallas as pl
from jax.experimental.pallas import tpu as pltpu


def _round_up(x: int, m: int) -> int:
    return ((x + m - 1) // m) * m


def _conv1d_kernel(*refs, kernel_size: int, dilation: int, padding: int,
                   t_tile: int, halo: int, t_in: int, compute_dtype,
                   has_bias: bool):
    """One (batch, time-tile) grid step.

    refs (in order):
      xl_ref: (C_in, halo)      left-halo block of the unpadded signal
      xm_ref: (C_in, t_tile)    main block
      xr_ref: (C_in, halo)      right-halo block
      w_ref:  (C_out, K*C_in)   weight, taps fused on the contraction axis
      b_ref:  (C_out, 1)        bias (only when has_bias)
      o_ref:  (C_out, t_tile)   output tile
    """
    if has_bias:
        xl_ref, xm_ref, xr_ref, w_ref, b_ref, o_ref = refs
    else:
        xl_ref, xm_ref, xr_ref, w_ref, o_ref = refs
        b_ref = None

    j = pl.program_id(1)
    width = t_tile + 2 * halo

    # Contiguous input window [j*t_tile - halo, (j+1)*t_tile + halo) assembled
    # from three lane-aligned blocks (all 128-multiples -> cheap concat).
    xw = jnp.concatenate([xl_ref[...], xm_ref[...], xr_ref[...]], axis=-1)

    # In-kernel zero padding: any column whose global signal position lies
    # outside [0, T) is conv padding (or boundary-block garbage) -> zero it.
    q = jax.lax.broadcasted_iota(jnp.int32, (1, width), 1)
    pos = j * t_tile - halo + q                        # global signal position
    valid = (pos >= 0) & (pos < t_in)
    xw = jnp.where(valid, xw, 0).astype(compute_dtype)

    # im2col over the K dilated taps (static lane offsets), then ONE deep
    # contraction on the MXU: (C_out, K*C_in) @ (K*C_in, t_tile).
    taps = [xw[:, halo - padding + k * dilation:
                  halo - padding + k * dilation + t_tile]
            for k in range(kernel_size)]
    stacked = taps[0] if kernel_size == 1 else jnp.concatenate(taps, axis=0)

    acc = jnp.dot(w_ref[...], stacked, preferred_element_type=jnp.float32)
    if has_bias:
        acc = acc + b_ref[...]                         # (C_out,1) bcast over time
    o_ref[...] = acc.astype(o_ref.dtype)


def conv_norm_forward(signal: jax.Array,
                      weight: jax.Array,
                      bias: jax.Array | None = None,
                      *,
                      stride: int = 1,
                      padding: int | None = None,
                      dilation: int = 1,
                      t_tile: int = 512,
                      compute_dtype=None) -> jax.Array:
    """Pallas implementation of ConvNorm.forward (nn.Conv1d, stride=1).

    signal: (B, C_in, T), weight: (C_out, C_in, K), bias: (C_out,) or None.
    Returns (B, C_out, T_out) in signal.dtype.
    """
    B, C_in, T = signal.shape
    C_out, C_in_w, K = weight.shape
    assert C_in == C_in_w, "channel mismatch between signal and weight"
    # TODO(synk): stride > 1 not implemented (ConvNorm default is stride=1).
    assert stride == 1, "only stride=1 is supported by this kernel"
    if padding is None:
        assert K % 2 == 1, "kernel_size must be odd when padding is None"
        padding = dilation * (K - 1) // 2
    T_out = T + 2 * padding - dilation * (K - 1)
    assert T_out >= 1, "output length must be positive"

    cdt = jnp.dtype(signal.dtype) if compute_dtype is None else jnp.dtype(compute_dtype)

    # Halo width (multiple of 128 lanes) covering the left pad and the right
    # reach of the dilated kernel.
    reach = max(padding, dilation * (K - 1) - padding, 1)
    H = _round_up(reach, 128)
    T_tile = _round_up(max(H, min(int(t_tile), _round_up(T_out, 128))), H)
    n_t = pl.cdiv(T_out, T_tile)
    n_mb = pl.cdiv(T, T_tile)          # main blocks covering the signal
    n_hb = pl.cdiv(T, H)               # halo blocks covering the signal
    hb_per_tile = T_tile // H

    # Weight re-layout: C_in on lanes, K taps fused into the contraction:
    # w2d[co, k*C_in + ci] = weight[co, ci, k].
    w2d = jnp.transpose(weight, (0, 2, 1)).reshape(C_out, K * C_in).astype(cdt)

    has_bias = bias is not None
    operands = [signal, signal, signal, w2d]
    if has_bias:
        operands.append(bias.reshape(C_out, 1).astype(jnp.float32))

    # Out-of-range block indices only occur when the corresponding window
    # positions are entirely outside [0, T); they are clipped here and their
    # contents are zeroed by the in-kernel position mask.
    def left_map(b, j):
        return (b, 0, jnp.clip(j * hb_per_tile - 1, 0, n_hb - 1))

    def main_map(b, j):
        return (b, 0, jnp.clip(j, 0, n_mb - 1))

    def right_map(b, j):
        return (b, 0, jnp.clip((j + 1) * hb_per_tile, 0, n_hb - 1))

    in_specs = [
        pl.BlockSpec((None, C_in, H), left_map),
        pl.BlockSpec((None, C_in, T_tile), main_map),
        pl.BlockSpec((None, C_in, H), right_map),
        # Loop-invariant operands: resident, single-buffered.
        pl.BlockSpec((C_out, K * C_in), lambda b, j: (0, 0),
                     pipeline_mode=pl.Buffered(1)),
    ]
    if has_bias:
        in_specs.append(pl.BlockSpec((C_out, 1), lambda b, j: (0, 0),
                                     pipeline_mode=pl.Buffered(1)))

    out_spec = pl.BlockSpec((None, C_out, T_tile), lambda b, j: (b, 0, j))

    # Explicit VMEM budget (2x headroom over the estimated tile working set).
    in_sz = jnp.dtype(signal.dtype).itemsize
    cd_sz = cdt.itemsize
    est = (2 * C_in * T_tile * in_sz            # main input, double-buffered
           + 4 * C_in * H * in_sz               # halos, double-buffered
           + C_out * K * C_in * cd_sz           # weight, single-buffered
           + C_out * 4                          # bias
           + 2 * C_out * T_tile * in_sz         # output, double-buffered
           + C_in * (T_tile + 2 * H) * cd_sz    # assembled window
           + K * C_in * T_tile * cd_sz          # im2col stack
           + C_out * T_tile * 4)                # f32 accumulator
    vmem_limit = int(min(max(2 * est, 16 * 2**20), 100 * 2**20))

    kernel = partial(_conv1d_kernel, kernel_size=K, dilation=dilation,
                     padding=padding, t_tile=T_tile, halo=H, t_in=T,
                     compute_dtype=cdt, has_bias=has_bias)

    return pl.pallas_call(
        kernel,
        out_shape=jax.ShapeDtypeStruct((B, C_out, T_out), signal.dtype),
        grid=(B, n_t),
        in_specs=in_specs,
        out_specs=out_spec,
        compiler_params=pltpu.CompilerParams(
            dimension_semantics=("parallel", "parallel"),
            vmem_limit_bytes=vmem_limit),
    )(*operands)


def _reference(signal, weight, bias, *, stride, padding, dilation):
    out = jax.lax.conv_general_dilated(
        signal.astype(jnp.float32), weight.astype(jnp.float32),
        window_strides=(stride,), padding=[(padding, padding)],
        rhs_dilation=(dilation,), dimension_numbers=("NCH", "OIH", "NCH"))
    if bias is not None:
        out = out + bias.astype(jnp.float32)[None, :, None]
    return out


if __name__ == "__main__":
    key = jax.random.PRNGKey(0)
    k = jax.random.split(key, 8)

    # Config 1: typical ConvNorm use (kernel_size=5, "same" padding, bias), f32.
    B, C_IN, C_OUT, K, T = 2, 4, 8, 5, 16
    x = jax.random.normal(k[0], (B, C_IN, T), dtype=jnp.float32)
    std = (2.0 / (C_IN * K)) ** 0.5           # kaiming_normal_ fan_in std
    w = std * jax.random.normal(k[1], (C_OUT, C_IN, K), dtype=jnp.float32)
    b = 0.1 * jax.random.normal(k[2], (C_OUT,), dtype=jnp.float32)

    out = jax.block_until_ready(conv_norm_forward(x, w, b))
    ref = _reference(x, w, b, stride=1, padding=(K - 1) // 2, dilation=1)
    assert out.shape == (B, C_OUT, T)
    assert jnp.allclose(out, ref, atol=1e-5, rtol=1e-5), "K=5 mismatch vs reference"

    # Config 2: module defaults (kernel_size=1, pointwise conv), no bias path.
    w1 = ((2.0 / C_IN) ** 0.5) * jax.random.normal(k[3], (C_OUT, C_IN, 1),
                                                   dtype=jnp.float32)
    out1 = jax.block_until_ready(conv_norm_forward(x, w1, None))
    ref1 = _reference(x, w1, None, stride=1, padding=0, dilation=1)
    assert out1.shape == (B, C_OUT, T)
    assert jnp.allclose(out1, ref1, atol=1e-5, rtol=1e-5), "K=1 mismatch vs reference"

    # Config 3: dilation=2, kernel_size=3, time axis split over several tiles
    # with a partial last tile (t_tile=128) -> exercises halo + edge masking.
    T3 = 300
    x3 = jax.random.normal(k[4], (B, C_IN, T3), dtype=jnp.float32)
    w3 = ((2.0 / (C_IN * 3)) ** 0.5) * jax.random.normal(k[5], (C_OUT, C_IN, 3),
                                                         dtype=jnp.float32)
    b3 = 0.1 * jax.random.normal(k[6], (C_OUT,), dtype=jnp.float32)
    out3 = jax.block_until_ready(
        conv_norm_forward(x3, w3, b3, dilation=2, t_tile=128))
    ref3 = _reference(x3, w3, b3, stride=1, padding=2, dilation=2)
    assert out3.shape == (B, C_OUT, T3)
    assert jnp.allclose(out3, ref3, atol=1e-5, rtol=1e-5), "dilated multi-tile mismatch"

    # Config 4: bf16 MXU feed (f32 accumulation), looser tolerance.
    out4 = jax.block_until_ready(
        conv_norm_forward(x3, w3, b3, dilation=2, t_tile=128,
                          compute_dtype=jnp.bfloat16))
    assert jnp.allclose(out4, ref3, atol=5e-2, rtol=5e-2), "bf16 path mismatch"

    print("KERNEL_OK")
</pallas_src>

<mosaic_0001>
module attributes {stable_mosaic.version = 11 : i64} {
  func.func @_conv1d_kernel(%arg0: i32, %arg1: i32, %arg2: memref<1x4x128xf32, #tpu.memory_space<vmem>>, %arg3: memref<1x4x128xf32, #tpu.memory_space<vmem>>, %arg4: memref<1x4x128xf32, #tpu.memory_space<vmem>>, %arg5: memref<8x20xf32, #tpu.memory_space<vmem>>, %arg6: memref<8x1xf32, #tpu.memory_space<vmem>>, %arg7: memref<1x8x128xf32, #tpu.memory_space<vmem>>) attributes {dimension_semantics = [#tpu.dimension_semantics<parallel>, #tpu.dimension_semantics<parallel>], iteration_bounds = array<i64: 2, 1>, scalar_prefetch = 0 : i64, scratch_operands = 0 : i64, tpu.core_type = #tpu.core_type<tc>, window_params = [{transform_indices = @transform_0, window_bounds = array<i64: 1, 4, 128>}, {transform_indices = @transform_1, window_bounds = array<i64: 1, 4, 128>}, {transform_indices = @transform_2, window_bounds = array<i64: 1, 4, 128>}, {pipeline_mode = #tpu.pipeline_mode<synchronous>, transform_indices = @transform_3, window_bounds = array<i64: 8, 20>}, {pipeline_mode = #tpu.pipeline_mode<synchronous>, transform_indices = @transform_4, window_bounds = array<i64: 8, 1>}, {transform_indices = @transform_5, window_bounds = array<i64: 1, 8, 128>}]} {
    %c0 = arith.constant 0 : index
    %c0_0 = arith.constant 0 : index
    %c0_1 = arith.constant 0 : index
    %0 = vector.load %arg2[%c0, %c0_0, %c0_1] : memref<1x4x128xf32, #tpu.memory_space<vmem>>, vector<1x4x128xf32>
    %1 = vector.shape_cast %0 : vector<1x4x128xf32> to vector<4x128xf32>
    %c0_2 = arith.constant 0 : index
    %c0_3 = arith.constant 0 : index
    %c0_4 = arith.constant 0 : index
    %2 = vector.load %arg3[%c0_2, %c0_3, %c0_4] : memref<1x4x128xf32, #tpu.memory_space<vmem>>, vector<1x4x128xf32>
    %3 = vector.shape_cast %2 : vector<1x4x128xf32> to vector<4x128xf32>
    %c0_5 = arith.constant 0 : index
    %c0_6 = arith.constant 0 : index
    %c0_7 = arith.constant 0 : index
    %4 = vector.load %arg4[%c0_5, %c0_6, %c0_7] : memref<1x4x128xf32, #tpu.memory_space<vmem>>, vector<1x4x128xf32>
    %5 = vector.shape_cast %4 : vector<1x4x128xf32> to vector<4x128xf32>
    %6 = tpu.concatenate %1, %3, %5 in 1 : vector<4x128xf32>, vector<4x128xf32>, vector<4x128xf32> -> vector<4x384xf32>
    %7 = tpu.iota {dimensions = array<i32: 1>} : vector<1x384xi32>
    %c128_i32 = arith.constant 128 : i32
    %8 = arith.muli %arg1, %c128_i32 : i32
    %c128_i32_8 = arith.constant 128 : i32
    %9 = arith.subi %8, %c128_i32_8 : i32
    %10 = vector.broadcast %9 : i32 to vector<1x384xi32>
    %11 = arith.addi %10, %7 : vector<1x384xi32>
    %c0_i32 = arith.constant 0 : i32
    %12 = vector.broadcast %c0_i32 : i32 to vector<1x384xi32>
    %13 = arith.cmpi sge, %11, %12 : vector<1x384xi32>
    %c16_i32 = arith.constant 16 : i32
    %14 = vector.broadcast %c16_i32 : i32 to vector<1x384xi32>
    %15 = arith.cmpi slt, %11, %14 : vector<1x384xi32>
    %16 = arith.andi %13, %15 : vector<1x384xi1>
    %c0_i32_9 = arith.constant 0 : i32
    %17 = arith.sitofp %c0_i32_9 : i32 to f32
    %18 = vector.shape_cast %16 : vector<1x384xi1> to vector<1x384xi1>
    %19 = vector.broadcast %18 : vector<1x384xi1> to vector<4x384xi1>
    %20 = vector.broadcast %17 : f32 to vector<4x384xf32>
    %21 = arith.select %19, %6, %20 : vector<4x384xi1>, vector<4x384xf32>
    %22 = vector.extract_strided_slice %21 {offsets = [0, 126], sizes = [4, 128], strides = [1, 1]} : vector<4x384xf32> to vector<4x128xf32>
    %23 = vector.extract_strided_slice %21 {offsets = [0, 127], sizes = [4, 128], strides = [1, 1]} : vector<4x384xf32> to vector<4x128xf32>
    %24 = vector.extract_strided_slice %21 {offsets = [0, 128], sizes = [4, 128], strides = [1, 1]} : vector<4x384xf32> to vector<4x128xf32>
    %25 = vector.extract_strided_slice %21 {offsets = [0, 129], sizes = [4, 128], strides = [1, 1]} : vector<4x384xf32> to vector<4x128xf32>
    %26 = vector.extract_strided_slice %21 {offsets = [0, 130], sizes = [4, 128], strides = [1, 1]} : vector<4x384xf32> to vector<4x128xf32>
    %27 = tpu.concatenate %22, %23, %24, %25, %26 in 0 : vector<4x128xf32>, vector<4x128xf32>, vector<4x128xf32>, vector<4x128xf32>, vector<4x128xf32> -> vector<20x128xf32>
    %c0_10 = arith.constant 0 : index
    %c0_11 = arith.constant 0 : index
    %28 = vector.load %arg5[%c0_10, %c0_11] : memref<8x20xf32, #tpu.memory_space<vmem>>, vector<8x20xf32>
    %cst = arith.constant dense<0.000000e+00> : vector<8x128xf32>
    %29 = tpu.matmul %28, %27, %cst {dimension_numbers = #tpu.dot_dimension_numbers<[1], [0], [0], [1], [0, 0, 1, 1], [], []>} : vector<8x20xf32>, vector<20x128xf32>, vector<8x128xf32> -> vector<8x128xf32>
    %c0_12 = arith.constant 0 : index
    %c0_13 = arith.constant 0 : index
    %30 = vector.load %arg6[%c0_12, %c0_13] : memref<8x1xf32, #tpu.memory_space<vmem>>, vector<8x1xf32>
    %31 = vector.broadcast %30 : vector<8x1xf32> to vector<8x128xf32>
    %32 = arith.addf %29, %31 : vector<8x128xf32>
    %c0_14 = arith.constant 0 : index
    %c0_15 = arith.constant 0 : index
    %c0_16 = arith.constant 0 : index
    %33 = vector.load %arg7[%c0_14, %c0_15, %c0_16] : memref<1x8x128xf32, #tpu.memory_space<vmem>>, vector<1x8x128xf32>
    %34 = vector.shape_cast %33 : vector<1x8x128xf32> to vector<8x128xf32>
    %35 = vector.shape_cast %32 : vector<8x128xf32> to vector<1x8x128xf32>
    tpu.vector_store %arg7[%c0_14, %c0_15, %c0_16], %35 {strides = array<i32>} : memref<1x8x128xf32, #tpu.memory_space<vmem>>, vector<1x8x128xf32>,
    return
  }
  func.func @transform_0(%arg0: i32, %arg1: i32) -> (i32, i32, i32) {
    %c1_i32 = arith.constant 1 : i32
    %0 = arith.muli %arg1, %c1_i32 : i32
    %c1_i32_0 = arith.constant 1 : i32
    %1 = arith.subi %0, %c1_i32_0 : i32
    %c0_i32 = arith.constant 0 : i32
    %c0_i32_1 = arith.constant 0 : i32
    %2 = arith.maxsi %c0_i32, %1 : i32
    %3 = arith.minsi %c0_i32_1, %2 : i32
    %c0_i32_2 = arith.constant 0 : i32
    %c0_i32_3 = arith.constant 0 : i32
    return %arg0, %c0_i32_2, %3 : i32, i32, i32
  }
  func.func @transform_1(%arg0: i32, %arg1: i32) -> (i32, i32, i32) {
    %c0_i32 = arith.constant 0 : i32
    %c0_i32_0 = arith.constant 0 : i32
    %0 = arith.maxsi %c0_i32, %arg1 : i32
    %1 = arith.minsi %c0_i32_0, %0 : i32
    %c0_i32_1 = arith.constant 0 : i32
    %c0_i32_2 = arith.constant 0 : i32
    return %arg0, %c0_i32_1, %1 : i32, i32, i32
  }
  func.func @transform_2(%arg0: i32, %arg1: i32) -> (i32, i32, i32) {
    %c1_i32 = arith.constant 1 : i32
    %0 = arith.addi %arg1, %c1_i32 : i32
    %c1_i32_0 = arith.constant 1 : i32
    %1 = arith.muli %0, %c1_i32_0 : i32
    %c0_i32 = arith.constant 0 : i32
    %c0_i32_1 = arith.constant 0 : i32
    %2 = arith.maxsi %c0_i32, %1 : i32
    %3 = arith.minsi %c0_i32_1, %2 : i32
    %c0_i32_2 = arith.constant 0 : i32
    %c0_i32_3 = arith.constant 0 : i32
    return %arg0, %c0_i32_2, %3 : i32, i32, i32
  }
  func.func @transform_3(%arg0: i32, %arg1: i32) -> (i32, i32) {
    %c0_i32 = arith.constant 0 : i32
    %c0_i32_0 = arith.constant 0 : i32
    %c0_i32_1 = arith.constant 0 : i32
    return %c0_i32, %c0_i32_0 : i32, i32
  }
  func.func @transform_4(%arg0: i32, %arg1: i32) -> (i32, i32) {
    %c0_i32 = arith.constant 0 : i32
    %c0_i32_0 = arith.constant 0 : i32
    %c0_i32_1 = arith.constant 0 : i32
    return %c0_i32, %c0_i32_0 : i32, i32
  }
  func.func @transform_5(%arg0: i32, %arg1: i32) -> (i32, i32, i32) {
    %c0_i32 = arith.constant 0 : i32
    %c0_i32_0 = arith.constant 0 : i32
    return %arg0, %c0_i32, %arg1 : i32, i32, i32
  }
}

</mosaic_0001>

<llo_original>
// kernel: tpu_custom_call.1
$region0: #{tpu_custom_call.1}
  #allocation0 [shape = 'u32[]', space=smem, size = 0x4, offset = 0x4, fixed_abs, tag = 'smem constant byte address 0x4 - core index']
  #allocation1 [shape = 'u32[144,128]{1,0:T(1,128)}', space=vmem, size = 0x12000, scoped, tag = 'internal scratch']
  %s0 = inlined_call_operand.vmem [shape: f32[2,4,16], index: 0, kind: input, shape index: {}]
  %s1 = inlined_call_operand.hbm [shape: f32[2,4,16], index: 1, kind: input, shape index: {}]
  %s2 = inlined_call_operand.hbm [shape: f32[2,4,16], index: 2, kind: input, shape index: {}]
  %s3 = inlined_call_operand.hbm [shape: f32[8,20], index: 3, kind: input, shape index: {}]
  %s4 = inlined_call_operand.vmem [shape: f32[8,1], index: 4, kind: input, shape index: {}]
  %s5 = inlined_call_operand.hbm [shape: f32[2,8,16], index: 5, kind: output, shape index: {}]
  %s6 = sld [smem:[#allocation0]]
  $region65: #{tpu_custom_call.1} parent=0
    _
  %s8 = ssub.s32 1, %s6
  %s9 = scalar_select 0, %s8, %s6
  $region1: #{tpu_custom_call.1} parent=0
    #allocation2 [shape = 'u8[4096]{0}', space=vmem, size = 0x1000, scoped, tag = 'input window, operand 1']
    #allocation3 [shape = 's32[2]{0}', space=sflag, size = 0x8, scoped, tag = 'scoped memory for tpu_custom_call.1']
    #allocation4 [shape = 's32[2]{0}', space=sflag, size = 0x8, scoped, tag = 'scoped memory for tpu_custom_call.1']
    #allocation5 [shape = 'u8[4096]{0}', space=vmem, size = 0x1000, scoped, tag = 'input window, operand 2']
    #allocation6 [shape = 's32[2]{0}', space=sflag, size = 0x8, scoped, tag = 'scoped memory for tpu_custom_call.1']
    #allocation7 [shape = 'u8[4096]{0}', space=vmem, size = 0x1000, scoped, tag = 'input window, operand 3, single buffered']
    #allocation8 [shape = 'u8[8192]{0}', space=vmem, size = 0x2000, scoped, tag = 'output window, operand 0']
    %10 = vsyncpa [#allocation3], 0
    %s11 = scalar_lea.sflag [#allocation3], 1
    %12 = vsyncpa %s11, 0
    %13 = vsyncpa [#allocation6], 0
    %s14 = scalar_lea.sflag [#allocation6], 1
    %15 = vsyncpa %s14, 0
    %16 = vsyncpa [#allocation4], 0
    %s17 = scalar_lea.sflag [#allocation4], 1
    %18 = vsyncpa %s17, 0
    loop: start=0, step=1, limit=4
    $region2: #{tpu_custom_call.1} parent=1 // loop_pre_header
      _
    $region3: #{tpu_custom_call.1} parent=1 // loop_header
      %s20 = sphi 0, %s24
      %p21 = scmp.ge.s32.totalorder %s20, 4
      %s27 = sphi 0, %s39
      %s28 = sphi 0, %s35
      %s29 = sphi 0, %s27
      %s30 = sphi 0, %s28
      %s31 = sphi 0, %s29
      %s32 = sphi 0, %s30
      %s54 = sphi 0, %s56
      %s57 = sphi 0, %s54
      %s58 = sphi 0, %s57
      %s74 = sphi 0, %s58
      %s90 = sphi 0, %s92
      %s93 = sphi 0, %s90
      %s94 = sphi 0, %s93
      %s110 = sphi 0, %s94
      %s128 = sphi 0, %s130
      %s131 = sphi 0, %s128
      %s132 = sphi 0, %s131
      %s148 = sphi 0, %s132
      %s152 = sphi 0, %s152
      %s154 = sphi 0, %s152
      %s155 = sphi 0, %s154
      %s169 = sphi 0, %s155
      %s173 = sphi 0, %s173
      %s175 = sphi 0, %s173
      %s176 = sphi 0, %s175
      %s190 = sphi 0, %s176
      %s198 = sphi 0, %s200
      %s201 = sphi 0, %s198
      %s202 = sphi 0, %s201
      %s218 = sphi 0, %s202
    $region4: #{tpu_custom_call.1} parent=1 // loop_header_branch
      %23 = sbr.rel (%p21) target = $region8
    $region5: #{tpu_custom_call.1} parent=1 // loop_body
      %s25 = ssub.s32 %s20, 1
      %s26 = ssub.s32 %s20, 2
      %s33 = sadd.s32 1, %s28
      %p34 = scmp.ge.s32.totalorder %s33, 1
      %s35 = scalar_select %p34, 0, %s33
      %s36 = sadd.s32 1, %s27
      %s37 = scalar_select %p34, %s36, %s27
      %p38 = scmp.ge.s32.totalorder %s37, 2
      %s39 = scalar_select %p38, 0, %s37
      %s40 = ssub.s32 %s28, 1
      %p41 = scmp.gt.s32.totalorder %s40, 0
      %s42 = scalar_select %p41, %s40, 0
      %p43 = scmp.lt.s32.totalorder %s42, 0
      %s44 = scalar_select %p43, %s42, 0
      %s45 = ssub.s32 %s35, 1
      %p46 = scmp.gt.s32.totalorder %s45, 0
      %s47 = scalar_select %p46, %s45, 0
      %p48 = scmp.lt.s32.totalorder %s47, 0
      %s49 = scalar_select %p48, %s47, 0
      %s50 = ssub.s32 %s27, %s39
      %s51 = ssub.s32 %s44, %s49
      %s52 = sor.u32 %s50, %s51
      %p53 = scmp.eq.s32.totalorder %s52, 0
      %s55 = sadd.s32 %s54, 1
      %s56 = scalar_select %p53, %s54, %s55
      %p59 = pneg %p53
      %p60 = scmp.eq.s32.totalorder %s20, 1
      %p61 = por %p59, %p60
      %p62 = scmp.ne.s32.totalorder %s54, %s57
      %p63 = scmp.eq.s32.totalorder %s20, 0
      %p64 = por %p62, %p63
      %p65 = scmp.ne.s32.totalorder %s54, %s57
      %p66 = scmp.eq.s32.totalorder %s25, 1
      %p67 = por %p65, %p66
      %p68 = scmp.ne.s32.totalorder %s57, %s58
      %p69 = scmp.eq.s32.totalorder %s25, 0
      %p70 = por %p68, %p69
      %p71 = scmp.ne.s32.totalorder %s57, %s58
      %p72 = scmp.eq.s32.totalorder %s26, 1
      %p73 = por %p71, %p72
      %p75 = scmp.ne.s32.totalorder %s58, %s74
      %p76 = scmp.eq.s32.totalorder %s26, 0
      %p77 = por %p75, %p76
      %p78 = scmp.gt.s32.totalorder %s28, 0
      %s79 = scalar_select %p78, %s28, 0
      %p80 = scmp.lt.s32.totalorder %s79, 0
      %s81 = scalar_select %p80, %s79, 0
      %p82 = scmp.gt.s32.totalorder %s35, 0
      %s83 = scalar_select %p82, %s35, 0
      %p84 = scmp.lt.s32.totalorder %s83, 0
      %s85 = scalar_select %p84, %s83, 0
      %s86 = ssub.s32 %s27, %s39
      %s87 = ssub.s32 %s81, %s85
      %s88 = sor.u32 %s86, %s87
      %p89 = scmp.eq.s32.totalorder %s88, 0
      %s91 = sadd.s32 %s90, 1
      %s92 = scalar_select %p89, %s90, %s91
      %p95 = pneg %p89
      %p96 = scmp.eq.s32.totalorder %s20, 1
      %p97 = por %p95, %p96
      %p98 = scmp.ne.s32.totalorder %s90, %s93
      %p99 = scmp.eq.s32.totalorder %s20, 0
      %p100 = por %p98, %p99
      %p101 = scmp.ne.s32.totalorder %s90, %s93
      %p102 = scmp.eq.s32.totalorder %s25, 1
      %p103 = por %p101, %p102
      %p104 = scmp.ne.s32.totalorder %s93, %s94
      %p105 = scmp.eq.s32.totalorder %s25, 0
      %p106 = por %p104, %p105
      %p107 = scmp.ne.s32.totalorder %s93, %s94
      %p108 = scmp.eq.s32.totalorder %s26, 1
      %p109 = por %p107, %p108
      %p111 = scmp.ne.s32.totalorder %s94, %s110
      %p112 = scmp.eq.s32.totalorder %s26, 0
      %p113 = por %p111, %p112
      %s114 = sadd.s32 %s28, 1
      %p115 = scmp.gt.s32.totalorder %s114, 0
      %s116 = scalar_select %p115, %s114, 0
      %p117 = scmp.lt.s32.totalorder %s116, 0
      %s118 = scalar_select %p117, %s116, 0
      %s119 = sadd.s32 %s35, 1
      %p120 = scmp.gt.s32.totalorder %s119, 0
      %s121 = scalar_select %p120, %s119, 0
      %p122 = scmp.lt.s32.totalorder %s121, 0
      %s123 = scalar_select %p122, %s121, 0
      %s124 = ssub.s32 %s27, %s39
      %s125 = ssub.s32 %s118, %s123
      %s126 = sor.u32 %s124, %s125
      %p127 = scmp.eq.s32.totalorder %s126, 0
      %s129 = sadd.s32 %s128, 1
      %s130 = scalar_select %p127, %s128, %s129
      %p133 = pneg %p127
      %p134 = scmp.eq.s32.totalorder %s20, 1
      %p135 = por %p133, %p134
      %p136 = scmp.ne.s32.totalorder %s128, %s131
      %p137 = scmp.eq.s32.totalorder %s20, 0
      %p138 = por %p136, %p137
      %p139 = scmp.ne.s32.totalorder %s128, %s131
      %p140 = scmp.eq.s32.totalorder %s25, 1
      %p141 = por %p139, %p140
      %p142 = scmp.ne.s32.totalorder %s131, %s132
      %p143 = scmp.eq.s32.totalorder %s25, 0
      %p144 = por %p142, %p143
      %p145 = scmp.ne.s32.totalorder %s131, %s132
      %p146 = scmp.eq.s32.totalorder %s26, 1
      %p147 = por %p145, %p146
      %p149 = scmp.ne.s32.totalorder %s132, %s148
      %p150 = scmp.eq.s32.totalorder %s26, 0
      %p151 = por %p149, %p150
      %s153 = sadd.s32 %s152, 1
      %p156 = scmp.eq.s32.totalorder %s20, 1
      %p157 = scmp.ne.s32.totalorder %s152, %s154
      %p158 = scmp.eq.s32.totalorder %s20, 0
      %p159 = por %p157, %p158
      %p160 = scmp.ne.s32.totalorder %s152, %s154
      %p161 = scmp.eq.s32.totalorder %s25, 1
      %p162 = por %p160, %p161
      %p163 = scmp.ne.s32.totalorder %s154, %s155
      %p164 = scmp.eq.s32.totalorder %s25, 0
      %p165 = por %p163, %p164
      %p166 = scmp.ne.s32.totalorder %s154, %s155
      %p167 = scmp.eq.s32.totalorder %s26, 1
      %p168 = por %p166, %p167
      %p170 = scmp.ne.s32.totalorder %s155, %s169
      %p171 = scmp.eq.s32.totalorder %s26, 0
      %p172 = por %p170, %p171
      %s174 = sadd.s32 %s173, 1
      %p177 = scmp.eq.s32.totalorder %s20, 1
      %p178 = scmp.ne.s32.totalorder %s173, %s175
      %p179 = scmp.eq.s32.totalorder %s20, 0
      %p180 = por %p178, %p179
      %p181 = scmp.ne.s32.totalorder %s173, %s175
      %p182 = scmp.eq.s32.totalorder %s25, 1
      %p183 = por %p181, %p182
      %p184 = scmp.ne.s32.totalorder %s175, %s176
      %p185 = scmp.eq.s32.totalorder %s25, 0
      %p186 = por %p184, %p185
      %p187 = scmp.ne.s32.totalorder %s175, %s176
      %p188 = scmp.eq.s32.totalorder %s26, 1
      %p189 = por %p187, %p188
      %p191 = scmp.ne.s32.totalorder %s176, %s190
      %p192 = scmp.eq.s32.totalorder %s26, 0
      %p193 = por %p191, %p192
      %s194 = ssub.s32 %s27, %s39
      %s195 = ssub.s32 %s28, %s35
      %s196 = sor.u32 %s194, %s195
      %p197 = scmp.eq.s32.totalorder %s196, 0
      %s199 = sadd.s32 %s198, 1
      %s200 = scalar_select %p197, %s198, %s199
      %p203 = pneg %p197
      %p204 = scmp.eq.s32.totalorder %s20, 1
      %p205 = por %p203, %p204
      %p206 = scmp.ne.s32.totalorder %s198, %s201
      %p207 = scmp.eq.s32.totalorder %s20, 0
      %p208 = por %p206, %p207
      %p209 = scmp.ne.s32.totalorder %s198, %s201
      %p210 = scmp.eq.s32.totalorder %s25, 1
      %p211 = por %p209, %p210
      %p212 = scmp.ne.s32.totalorder %s201, %s202
      %p213 = scmp.eq.s32.totalorder %s25, 0
      %p214 = por %p212, %p213
      %p215 = scmp.ne.s32.totalorder %s201, %s202
      %p216 = scmp.eq.s32.totalorder %s26, 1
      %p217 = por %p215, %p216
      %p219 = scmp.ne.s32.totalorder %s202, %s218
      %p220 = scmp.eq.s32.totalorder %s26, 0
      %p221 = por %p219, %p220
      %p222 = scmp.le.s32.totalorder 1, %s20
      %p223 = scmp.lt.s32.totalorder %s20, 3
      %p224 = pnand %p222, %p223
      %p225 = pneg %p224
      // Predicated region
      $region9: #{tpu_custom_call.1} parent=5 // pred_check
        _
      $region10: #{tpu_custom_call.1} parent=5 // pred_check_branch
        %227 = sbr.rel (%p224) target = $region12
      $region11: #{tpu_custom_call.1} parent=5 // pred_region
        %s228 = ssub.s32 %s20, 1
        // Predicated region
        $region13: #{tpu_custom_call.1} parent=11 // pred_check
          %p229 = pneg %p165
        $region14: #{tpu_custom_call.1} parent=11 // pred_check_branch
          %231 = sbr.rel (%p229) target = $region16
        $region15: #{tpu_custom_call.1} parent=11 // pred_region
          %s233 = ssub.s32 128, 128
          %234 = vsyncadd [#allocation6], %s233
          %s236 = sshll.u32 [#allocation7], 4
          %s237 = int_to_ptr.vmem [resolvable:$true] %s236
          %239 = dma.hbm_to_vmem [thread:$0]  %s3, 128, %s237, [#allocation6]
        $region16: #{tpu_custom_call.1} parent=11 // pred_fallthru
          _
        // Predicated region
        $region17: #{tpu_custom_call.1} parent=11 // pred_check
          %p240 = pneg %p186
        $region18: #{tpu_custom_call.1} parent=11 // pred_check_branch
          %242 = sbr.rel (%p240) target = $region20
        $region19: #{tpu_custom_call.1} parent=11 // pred_region
          _
        $region20: #{tpu_custom_call.1} parent=11 // pred_fallthru
          _
      $region12: #{tpu_custom_call.1} parent=5 // pred_fallthru
        _
      %p243 = scmp.lt.s32.totalorder %s20, 2
      // Predicated region
      $region21: #{tpu_custom_call.1} parent=5 // pred_check
        %p244 = pneg %p243
      $region22: #{tpu_custom_call.1} parent=5 // pred_check_branch
        %246 = sbr.rel (%p244) target = $region24
      $region23: #{tpu_custom_call.1} parent=5 // pred_region
        // Predicated region
        $region25: #{tpu_custom_call.1} parent=23 // pred_check
          %p247 = pneg %p64
        $region26: #{tpu_custom_call.1} parent=23 // pred_check_branch
          %249 = sbr.rel (%p247) target = $region28
        $region27: #{tpu_custom_call.1} parent=23 // pred_region
          %s250 = ssub.s32 %s28, 1
          %p251 = scmp.gt.s32.totalorder %s250, 0
          %s252 = scalar_select %p251, %s250, 0
          %p253 = scmp.lt.s32.totalorder %s252, 0
          %s254 = scalar_select %p253, %s252, 0
          %p255 = scmp.lt.s32.totalorder %s27, 1
          %s256 = scalar_select %p255, %s27, 1
          %p257 = scmp.lt.s32.totalorder %s254, 0
          %s258 = scalar_select %p257, %s254, 0
          %s259 = sadd.s32 %s258, %s256
          %s260 = smul.addr %s259, 4
          %s261 = scalar_lea.vmem %s0, %s260
          %s262 = ssub.s32 %s28, 1
          %p263 = scmp.gt.s32.totalorder %s262, 0
          %s264 = scalar_select %p263, %s262, 0
          %p265 = scmp.lt.s32.totalorder %s264, 0
          %s266 = scalar_select %p265, %s264, 0
        $region28: #{tpu_custom_call.1} parent=23 // pred_fallthru
          _
        // Predicated region
        $region29: #{tpu_custom_call.1} parent=23 // pred_check
          %p267 = pneg %p100
        $region30: #{tpu_custom_call.1} parent=23 // pred_check_branch
          %269 = sbr.rel (%p267) target = $region32
        $region31: #{tpu_custom_call.1} parent=23 // pred_region
          %s270 = sand.u32 %s90, 1
          %s271 = scalar_lea.sflag [#allocation3], %s270
          %s272 = sand.u32 %s90, 1
          %s273 = smul.addr %s272, 4
          %s274 = scalar_lea.vmem [#allocation2], %s273
          %p275 = scmp.gt.s32.totalorder %s28, 0
          %s276 = scalar_select %p275, %s28, 0
          %p277 = scmp.lt.s32.totalorder %s276, 0
          %s278 = scalar_select %p277, %s276, 0
          %s280 = ssub.s32 64, 64
          %281 = vsyncadd %s271, %s280
          %s282 = sadd.s32 %s278, %s27
          %s283 = smul.addr %s282, 64
          %s284 = scalar_lea.hbm %s1, %s283
          %s286 = sshll.u32 %s274, 4
          %s287 = int_to_ptr.vmem [resolvable:$true] %s286
          %289 = dma.hbm_to_vmem [thread:$0]  %s284, 64, %s287, %s271
        $region32: #{tpu_custom_call.1} parent=23 // pred_fallthru
          _
        // Predicated region
        $region33: #{tpu_custom_call.1} parent=23 // pred_check
          %p290 = pneg %p138
        $region34: #{tpu_custom_call.1} parent=23 // pred_check_branch
          %292 = sbr.rel (%p290) target = $region36
        $region35: #{tpu_custom_call.1} parent=23 // pred_region
          %s293 = sand.u32 %s20, 1
          %s294 = scalar_lea.sflag [#allocation6], %s293
          %s295 = sand.u32 %s128, 1
          %s296 = smul.addr %s295, 4
          %s297 = scalar_lea.vmem [#allocation5], %s296
          %s298 = sadd.s32 %s28, 1
          %p299 = scmp.gt.s32.totalorder %s298, 0
          %s300 = scalar_select %p299, %s298, 0
          %p301 = scmp.lt.s32.totalorder %s300, 0
          %s302 = scalar_select %p301, %s300, 0
          %s304 = ssub.s32 64, 64
          %305 = vsyncadd %s294, %s304
          %s306 = sadd.s32 %s302, %s27
          %s307 = smul.addr %s306, 64
          %s308 = scalar_lea.hbm %s2, %s307
          %s310 = sshll.u32 %s297, 4
          %s311 = int_to_ptr.vmem [resolvable:$true] %s310
          %313 = dma.hbm_to_vmem [thread:$0]  %s308, 64, %s311, %s294
        $region36: #{tpu_custom_call.1} parent=23 // pred_fallthru
          _
      $region24: #{tpu_custom_call.1} parent=5 // pred_fallthru
        _
      %p314 = scmp.le.s32.totalorder 1, %s20
      %p315 = scmp.lt.s32.totalorder %s20, 3
      %p316 = pnand %p314, %p315
      %p317 = pneg %p316
      // Predicated region
      $region37: #{tpu_custom_call.1} parent=5 // pred_check
        _
      $region38: #{tpu_custom_call.1} parent=5 // pred_check_branch
        %319 = sbr.rel (%p316) target = $region40
      $region39: #{tpu_custom_call.1} parent=5 // pred_region
        %s320 = ssub.s32 %s20, 1
        %s321 = sand.u32 %s93, 1
        %s322 = scalar_lea.sflag [#allocation3], %s321
        %s323 = sand.u32 %s93, 1
        %s324 = smul.addr %s323, 4
        %s325 = scalar_lea.vmem [#allocation2], %s324
        // Predicated region
        $region41: #{tpu_custom_call.1} parent=39 // pred_check
          %p326 = pneg %p106
        $region42: #{tpu_custom_call.1} parent=39 // pred_check_branch
          %328 = sbr.rel (%p326) target = $region44
        $region43: #{tpu_custom_call.1} parent=39 // pred_region
          %329 = dma.done %s322, 64
        $region44: #{tpu_custom_call.1} parent=39 // pred_fallthru
          _
        %s330 = sand.u32 %s25, 1
        %s331 = scalar_lea.sflag [#allocation6], %s330
        %s332 = sand.u32 %s131, 1
        %s333 = smul.addr %s332, 4
        %s334 = scalar_lea.vmem [#allocation5], %s333
        // Predicated region
        $region45: #{tpu_custom_call.1} parent=39 // pred_check
          %p335 = pneg %p144
        $region46: #{tpu_custom_call.1} parent=39 // pred_check_branch
          %337 = sbr.rel (%p335) target = $region48
        $region47: #{tpu_custom_call.1} parent=39 // pred_region
          %338 = dma.done %s331, 64
        $region48: #{tpu_custom_call.1} parent=39 // pred_fallthru
          _
        // Predicated region
        $region49: #{tpu_custom_call.1} parent=39 // pred_check
          %p339 = pneg %p165
        $region50: #{tpu_custom_call.1} parent=39 // pred_check_branch
          %341 = sbr.rel (%p339) target = $region52
        $region51: #{tpu_custom_call.1} parent=39 // pred_region
          %342 = dma.done [#allocation6], 128
        $region52: #{tpu_custom_call.1} parent=39 // pred_fallthru
          _
        %s343 = ssub.s32 %s30, 1
        %p344 = scmp.gt.s32.totalorder %s343, 0
        %s345 = scalar_select %p344, %s343, 0
        %p346 = scmp.lt.s32.totalorder %s345, 0
        %s347 = scalar_select %p346, %s345, 0
        %p348 = scmp.lt.s32.totalorder %s29, 1
        %s349 = scalar_select %p348, %s29, 1
        %p350 = scmp.lt.s32.totalorder %s347, 0
        %s351 = scalar_select %p350, %s347, 0
        %s352 = sadd.s32 %s351, %s349
        %s353 = smul.addr %s352, 4
        %s354 = scalar_lea.vmem %s0, %s353
        %p355 = pneg %p70
        %p356 = pneg %p67
        %s357 = sand.u32 %s93, 1
        %s358 = scalar_lea.sflag [#allocation3], %s357
        %s359 = sand.u32 %s93, 1
        %s360 = smul.addr %s359, 4
        %s361 = scalar_lea.vmem [#allocation2], %s360
        %p362 = pneg %p106
        %p363 = pneg %p103
        %s364 = sand.u32 %s25, 1
        %s365 = scalar_lea.sflag [#allocation6], %s364
        %s366 = sand.u32 %s131, 1
        %s367 = smul.addr %s366, 4
        %s368 = scalar_lea.vmem [#allocation5], %s367
        %p369 = pneg %p144
        %p370 = pneg %p141
        %p371 = pneg %p165
        %p372 = pneg %p162
        %p373 = pneg %p186
        %p374 = pneg %p183
        %p375 = pneg %p214
        %p376 = pneg %p211
        %s377 = sand.u32 %s201, 1
        %s378 = scalar_lea.sflag [#allocation4], %s377
        %s379 = sand.u32 %s201, 1
        %s380 = smul.addr %s379, 8
        %s381 = scalar_lea.vmem [#allocation8], %s380
        %s382 = ssub.s32 %s30, 1
        %p383 = scmp.gt.s32.totalorder %s382, 0
        %s384 = scalar_select %p383, %s382, 0
        %p385 = scmp.lt.s32.totalorder %s384, 0
        %s386 = scalar_select %p385, %s384, 0
        %p387 = scmp.lt.s32.totalorder %s29, 1
        %s388 = scalar_select %p387, %s29, 1
        %p389 = scmp.lt.s32.totalorder %s386, 0
        %s390 = scalar_select %p389, %s386, 0
        %s391 = sadd.s32 %s390, %s388
        %s392 = smul.addr %s391, 4
        %s393 = scalar_lea.vmem %s0, %s392
        %s394 = ssub.s32 %s30, 1
        %p395 = scmp.gt.s32.totalorder %s394, 0
        %s396 = scalar_select %p395, %s394, 0
        %p397 = scmp.lt.s32.totalorder %s396, 0
        %s398 = scalar_select %p397, %s396, 0
        %p399 = scmp.gt.s32.totalorder %s30, 0
        %s400 = scalar_select %p399, %s30, 0
        %p401 = scmp.lt.s32.totalorder %s400, 0
        %s402 = scalar_select %p401, %s400, 0
        %s403 = sadd.s32 %s30, 1
        %p404 = scmp.gt.s32.totalorder %s403, 0
        %s405 = scalar_select %p404, %s403, 0
        %p406 = scmp.lt.s32.totalorder %s405, 0
        %s407 = scalar_select %p406, %s405, 0
        %v408 = vld [vmem:[%s393] sm:$0xf]
        %v409 = vld [vmem:[%s325] sm:$0xf]
        %v410 = vld [vmem:[%s334] sm:$0xf]
        %v411 = vlaneseq
        %v412 = vand.u32 %v411, 127
        %v413 = vadd.s32 %v412, 128
        %v414 = vadd.s32 %v412, 256
        %s415 = smul.u32 %s30, 128
        %s416 = ssub.s32 %s415, 128
        %v417 = vstv %s416
        %v418 = vadd.s32 %v417, %v412
        %v419 = vadd.s32 %v417, %v413
        %v420 = vadd.s32 %v417, %v414
        %vm421 = vcmp.ge.s32.totalorder %v418, 0
        %vm422 = vcmp.ge.s32.totalorder %v419, 0
        %vm423 = vcmp.ge.s32.totalorder %v420, 0
        %vm424 = vcmp.lt.s32.totalorder %v418, 16
        %vm425 = vcmp.lt.s32.totalorder %v419, 16
        %vm426 = vcmp.lt.s32.totalorder %v420, 16
        %vm427 = vmand %vm421, %vm424
        %vm428 = vmand %vm422, %vm425
        %vm429 = vmand %vm423, %vm426
        %v430 = vsel %vm427, 1, 0
        %v431 = vsel %vm428, 1, 0
        %v432 = vsel %vm429, 1, 0
        %vm433 = vcmp.eq.s32.totalorder %v430, 1
        %vm434 = vcmp.eq.s32.totalorder %v431, 1
        %vm435 = vcmp.eq.s32.totalorder %v432, 1
        %v436 = vsel %vm433, %v408, 0.0
        %v437 = vsel %vm434, %v409, 0.0
        %v438 = vsel %vm435, %v410, 0.0
        %v441 = vrot.slane %v436, 4
        %v442 = vrot.slane %v437, 4
        %443 = vrot.lane.b32.xlu0 %v441, 127
        %v444 = vpop.permute.xlu0 %443
        %445 = vrot.lane.b32.xlu0 %v442, 127
        %v446 = vpop.permute.xlu0 %445
        %vm447 = vcmask 1039360
        %v448 = vsel %vm447, %v444, %v446
        %451 = vrot.lane.b32.xlu0 %v437, 126
        %v452 = vpop.permute.xlu0 %451
        %v455 = vrot.slane %v438, 4
        %456 = vrot.lane.b32.xlu0 %v442, 125
        %v457 = vpop.permute.xlu0 %456
        %458 = vrot.lane.b32.xlu0 %v455, 125
        %v459 = vpop.permute.xlu0 %458
        %vm460 = vcmask 1022976
        %v461 = vsel %vm460, %v457, %v459
        %464 = vrot.lane.b32.xlu0 %v437, 124
        %v465 = vpop.permute.xlu0 %464
        %466 = vrot.lane.b32.xlu0 %v438, 124
        %v467 = vpop.permute.xlu0 %466
        %vm468 = vcmask 1014784
        %v469 = vsel %vm468, %v465, %v467
        %vm470 = vcmask 1043456
        %v471 = vsel %vm470, %v436, %v448
        %v472 = vsel %vm470, %v437, %v446
        %v473 = vsel %vm470, %v452, %v457
        %v474 = vsel %vm470, %v452, %v461
        %v475 = vld [vmem:[#allocation7] sm:$0xff]
        %v476 = vld [vmem:[%s4] sm:$0xff]
        %478 = vset.pattern.permute.xlu0 0
        %479 = vperm.xlu0 %478, %v476
        %v480 = vpop.permute.xlu0 %479
        %486 = vrot.lane.b32.xlu0 %v471, 2
        %v487 = vpop.permute.xlu0 %486
        %488 = vrot.lane.b32.xlu0 %v472, 2
        %v489 = vpop.permute.xlu0 %488
        %490 = vrot.lane.b32.xlu0 %v473, 2
        %v491 = vpop.permute.xlu0 %490
        %492 = vrot.lane.b32.xlu0 %v474, 2
        %v493 = vpop.permute.xlu0 %492
        %494 = vrot.lane.b32.xlu0 %v465, 2
        %v495 = vpop.permute.xlu0 %494
        %496 = vrot.lane.b32.xlu0 %v469, 2
        %v497 = vpop.permute.xlu0 %496
        %vm498 = vcmask 15360
        %v499 = vsel %vm498, %v487, %v489
        %v500 = vsel %vm498, %v491, %v493
        %v501 = vsel %vm498, %v495, %v497
        %vm504 = vcmask 162816
        %v506 = vsel %vm504, %v475, 0
        %v508 = vsel %vm470, %v501, 0
        %510 = vmatprep.subr.mxu0 0.0
        %511 = vmatpush1.msra.mxu0 0.0
        %512 = vmatprep.subr.mxu0 0.0
        %513 = vmatpush1.msra.mxu0 0.0
        %514 = vmatprep.subr.mxu0 0.0
        %515 = vmatpush1.msra.mxu0 0.0
        %516 = vmatprep.subr.mxu0 0.0
        %517 = vmatpush1.msra.mxu0 0.0
        %518 = vmatprep.subr.mxu0 0.0
        %519 = vmatpush1.msra.mxu0 0.0
        %520 = vmatprep.subr.mxu0 0.0
        %521 = vmatpush1.msra.mxu0 0.0
        %522 = vmatprep.subr.mxu0 0.0
        %523 = vmatpush1.msra.mxu0 0.0
        %524 = vmatprep.subr.mxu0 0.0
        %525 = vmatpush1.msra.mxu0 0.0
        %526 = vmatprep.subr.mxu0 0.0
        %527 = vmatpush1.msra.mxu0 0.0
        %528 = vmatprep.subr.mxu0 0.0
        %529 = vmatpush1.msra.mxu0 0.0
        %530 = vmatprep.subr.mxu0 0.0
        %531 = vmatpush1.msra.mxu0 0.0
        %532 = vmatprep.subr.mxu0 0.0
        %533 = vmatpush1.msra.mxu0 0.0
        %534 = vmatprep.subr.mxu0 0.0
        %535 = vmatpush1.msra.mxu0 0.0
        %536 = vmatprep.subr.mxu0 0.0
        %537 = vmatpush1.msra.mxu0 %v508
        %538 = vmatprep.subr.mxu0 0.0
        %539 = vmatpush1.msra.mxu0 %v500
        %540 = vmatprep.subr.mxu0 0.0
        %541 = vmatpush1.msra.mxu0 %v499
        %542 = vmatprep.subr.mxu0 0.0
        %543 = vmatpush2.msra.mxu0 0.0
        %544 = vmatprep.subr.mxu0 0.0
        %545 = vmatpush2.msra.mxu0 0.0
        %546 = vmatprep.subr.mxu0 0.0
        %547 = vmatpush2.msra.mxu0 0.0
        %548 = vmatprep.subr.mxu0 0.0
        %549 = vmatpush2.msra.mxu0 0.0
        %550 = vmatprep.subr.mxu0 0.0
        %551 = vmatpush2.msra.mxu0 0.0
        %552 = vmatprep.subr.mxu0 0.0
        %553 = vmatpush2.msra.mxu0 0.0
        %554 = vmatprep.subr.mxu0 0.0
        %555 = vmatpush2.msra.mxu0 0.0
        %556 = vmatprep.subr.mxu0 0.0
        %557 = vmatpush2.msra.mxu0 0.0
        %558 = vmatprep.subr.mxu0 0.0
        %559 = vmatpush2.msra.mxu0 0.0
        %560 = vmatprep.subr.mxu0 0.0
        %561 = vmatpush2.msra.mxu0 0.0
        %562 = vmatprep.subr.mxu0 0.0
        %563 = vmatpush2.msra.mxu0 0.0
        %564 = vmatprep.subr.mxu0 0.0
        %565 = vmatpush2.msra.mxu0 0.0
        %566 = vmatprep.subr.mxu0 0.0
        %567 = vmatpush2.msra.mxu0 0.0
        %568 = vmatprep.subr.mxu0 0.0
        %569 = vmatpush2.msra.mxu0 0.0
        %570 = vmatprep.subr.mxu0 0.0
        %571 = vmatpush2.msra.mxu0 0.0
        %572 = vmatprep.subr.mxu0 0.0
        %573 = vmatpush2.msra.mxu0 0.0
        %574 = vmatprep.mubr.f32.mxu0 0.0
        %575 = vmatmul.mubr.f32.gmra.mxu0 %v506
        %v576 = vpop.f32.mrf.mxu0
        %v577 = vadd.f32 %v480, %v576
        %v578 = vpop.f32.mrf.mxu0
        %579 = vdwg.mxu0
        %580 = vst [vmem:[%s381] sm:$0xff] %v577
        %s581 = sand.u32 %s201, 1
        %s582 = scalar_lea.sflag [#allocation4], %s581
        %s583 = sand.u32 %s201, 1
        %s584 = smul.addr %s583, 8
        %s585 = scalar_lea.vmem [#allocation8], %s584
        // Predicated region
        $region53: #{tpu_custom_call.1} parent=39 // pred_check
          %p586 = pneg %p211
        $region54: #{tpu_custom_call.1} parent=39 // pred_check_branch
          %588 = sbr.rel (%p586) target = $region56
        $region55: #{tpu_custom_call.1} parent=39 // pred_region
          %s590 = ssub.s32 128, 128
          %591 = vsyncadd %s582, %s590
          %s592 = sadd.s32 %s30, %s29
          %s593 = smul.addr %s592, 128
          %s594 = scalar_lea.hbm %s5, %s593
          %s596 = sshll.u32 %s585, 4
          %s597 = int_to_ptr.vmem [resolvable:$true] %s596
          %599 = dma.vmem_to_hbm [thread:$0]  %s597, 128, %s594, %s582
        $region56: #{tpu_custom_call.1} parent=39 // pred_fallthru
          _
      $region40: #{tpu_custom_call.1} parent=5 // pred_fallthru
        _
      %p600 = scmp.le.s32.totalorder 2, %s20
      // Predicated region
      $region57: #{tpu_custom_call.1} parent=5 // pred_check
        %p601 = pneg %p600
      $region58: #{tpu_custom_call.1} parent=5 // pred_check_branch
        %603 = sbr.rel (%p601) target = $region60
      $region59: #{tpu_custom_call.1} parent=5 // pred_region
        %s604 = ssub.s32 %s20, 2
        // Predicated region
        $region61: #{tpu_custom_call.1} parent=59 // pred_check
          %p605 = pneg %p217
        $region62: #{tpu_custom_call.1} parent=59 // pred_check_branch
          %607 = sbr.rel (%p605) target = $region64
        $region63: #{tpu_custom_call.1} parent=59 // pred_region
          %s608 = sand.u32 %s202, 1
          %s609 = scalar_lea.sflag [#allocation4], %s608
          %s610 = sand.u32 %s202, 1
          %s611 = smul.addr %s610, 8
          %s612 = scalar_lea.vmem [#allocation8], %s611
          %613 = dma.done %s609, 128
        $region64: #{tpu_custom_call.1} parent=59 // pred_fallthru
          _
      $region60: #{tpu_custom_call.1} parent=5 // pred_fallthru
        _
    $region6: #{tpu_custom_call.1} parent=1 // loop_footer
      %s24 = sadd.s32 1, %s20
    $region7: #{tpu_custom_call.1} parent=1 // loop_footer_branch
      %19 = sbr.rel target = $region3
    $region8: #{tpu_custom_call.1} parent=1 // loop_exit
      _
    %614 = vsyncpa [#allocation3], 1
    %s615 = scalar_lea.sflag [#allocation3], 1
    %616 = vsyncpa %s615, 1
    %617 = vsyncpa [#allocation6], 1
    %s618 = scalar_lea.sflag [#allocation6], 1
    %619 = vsyncpa %s618, 1
    %620 = vsyncpa [#allocation4], 1
    %s621 = scalar_lea.sflag [#allocation4], 1
    %622 = vsyncpa %s621, 1

</llo_original>
